<compile_context>
chip_gen: v7x
topology: tpu7x:2x2x1
jax: 0.10.0
libtpu: 0.0.40
codegen_flags: <defaults>
</compile_context>

<pallas_src>
import functools

import numpy as np

import jax
import jax.numpy as jnp
from jax.experimental import pallas as pl
from jax.experimental.pallas import tpu as pltpu

BN_EPS = 1e-5
LEAKY_SLOPE = 0.2


# ---------------------------------------------------------------------------
# Pallas kernel: fused depthwise-3x3 (+folded BN1) + LeakyReLU + 1x1 (+BN2)
# ---------------------------------------------------------------------------
def _up_block_kernel(x_ref, dwb_ref, pw_ref, b2_ref, cmask_ref, o_ref, *, H, W):
    """One (C, H*W) slab: DW3x3(+BN1) -> LeakyReLU(0.2) -> 1x1(+BN2).

    x_ref:     (1, C, L)    act dtype, L = H*W + 2*W + 2 (row-padded flat image)
    dwb_ref:   (C, 10)      f32; cols 0..8 = BN1-folded depthwise taps
                            (row-major kh,kw), col 9 = BN1 shift
    pw_ref:    (Cout, C)    act dtype; BN2 scale folded in
    b2_ref:    (Cout, 1)    f32; BN2 shift
    cmask_ref: (2, HW)      f32; [0] = (w != 0), [1] = (w != W-1) column masks
    o_ref:     (1, Cout, HW) f32 (lane-dense; already NCHW after reshape)
    """
    HW = H * W
    off = W + 1                                   # leading zero-pad length
    dwb = dwb_ref[...]                            # (C, 10), single hoisted load
    cmask = cmask_ref[...]                        # (2, HW)

    # Nine taps generated in-kernel via static slices of the padded slab.
    acc = None
    k = 0
    for dh in (-1, 0, 1):
        for dw in (-1, 0, 1):
            start = off + dh * W + dw             # static, always in-bounds
            tap = x_ref[0, :, start:start + HW].astype(jnp.float32)  # (C, HW)
            if dw == -1:                           # kill horizontal wrap-around
                tap = tap * cmask[0:1]
            elif dw == 1:
                tap = tap * cmask[1:2]
            contrib = tap * dwb[:, k:k + 1]        # per-channel tap weight
            acc = contrib if acc is None else acc + contrib
            k += 1

    y = acc + dwb[:, 9:10]                         # BN1 shift
    y = jnp.where(y >= 0.0, y, LEAKY_SLOPE * y)    # LeakyReLU(0.2)

    # 1x1 conv == (Cout, C) @ (C, HW) on the MXU, f32 accumulate.
    y2 = jnp.dot(pw_ref[...], y.astype(pw_ref.dtype),
                 preferred_element_type=jnp.float32)
    o_ref[0] = y2 + b2_ref[...]                    # BN2 shift


def _fused_conv_pallas(x_nchw, dwb, pw, b2, *, act_dtype):
    """x_nchw: (N, C, H, W) f32 -> (N, Cout, H, W) f32."""
    N, C, H, W = x_nchw.shape
    Cout = pw.shape[0]
    HW = H * W
    L = HW + 2 * W + 2

    # Lane-dense activation slab: flatten spatial and add one zero row
    # (+1 element) of padding per side so every 3x3 tap is an in-bounds static
    # slice inside the kernel (no 9x im2col blow-up in HBM).
    x_slab = jnp.pad(x_nchw.reshape(N, C, HW),
                     ((0, 0), (0, 0), (W + 1, W + 1))).astype(act_dtype)

    # Column-validity masks (kill horizontal wrap of the flat slices); tiny,
    # constant index_map => resident across all grid steps.
    w_idx = jnp.arange(HW, dtype=jnp.int32) % W
    cmask = jnp.stack([(w_idx != 0), (w_idx != W - 1)]).astype(jnp.float32)

    pw_k = pw.astype(act_dtype)

    kernel = functools.partial(_up_block_kernel, H=H, W=W)

    bytes_accessed = (x_slab.size * x_slab.dtype.itemsize   # activation in
                      + N * Cout * HW * 4                   # output
                      + dwb.size * 4
                      + pw_k.size * pw_k.dtype.itemsize
                      + b2.size * 4 + cmask.size * 4)
    cost = pl.CostEstimate(
        flops=N * (2 * 9 * C * HW + 2 * Cout * C * HW),
        transcendentals=0,
        bytes_accessed=int(bytes_accessed))

    # NOTE: at production sizes (large C / HW) add an HW grid axis (so v7x
    # gets >=2 steps per TensorCore and VMEM stays bounded) and raise
    # vmem_limit_bytes with headroom.  At this size one block/sample is fine.
    out = pl.pallas_call(
        kernel,
        out_shape=jax.ShapeDtypeStruct((N, Cout, HW), jnp.float32),
        grid=(N,),
        in_specs=[
            pl.BlockSpec((1, C, L), lambda n: (n, 0, 0)),
            pl.BlockSpec((C, 10), lambda n: (0, 0)),
            pl.BlockSpec((Cout, C), lambda n: (0, 0)),
            pl.BlockSpec((Cout, 1), lambda n: (0, 0)),
            pl.BlockSpec((2, HW), lambda n: (0, 0)),
        ],
        out_specs=pl.BlockSpec((1, Cout, HW), lambda n: (n, 0, 0)),
        compiler_params=pltpu.CompilerParams(
            dimension_semantics=("parallel",)),
        cost_estimate=cost,
    )(x_slab, dwb, pw_k, b2, cmask)
    return out.reshape(N, Cout, H, W)              # free metadata reshape


# ---------------------------------------------------------------------------
# Glue: gather-free bilinear x2 upsample (PyTorch align_corners=False), pad,
#       channel concat.  All NCHW, no transposes; fused under jit.
# ---------------------------------------------------------------------------
def _upsample_axis_x2(x, axis):
    """Double `axis` using the fixed two-phase (0.25/0.75) bilinear weights."""
    L = x.shape[axis]
    first = jax.lax.slice_in_dim(x, 0, 1, axis=axis)
    last = jax.lax.slice_in_dim(x, L - 1, L, axis=axis)
    prev = jnp.concatenate(
        [first, jax.lax.slice_in_dim(x, 0, L - 1, axis=axis)], axis=axis)
    nxt = jnp.concatenate(
        [jax.lax.slice_in_dim(x, 1, L, axis=axis), last], axis=axis)
    even = 0.25 * prev + 0.75 * x        # output positions 2i   (clamped at 0)
    odd = 0.75 * x + 0.25 * nxt          # output positions 2i+1 (clamped at L-1)
    inter = jnp.stack([even, odd], axis=axis + 1)
    new_shape = list(x.shape)
    new_shape[axis] = 2 * L
    return inter.reshape(new_shape)


def bilinear_upsample_x2(x):  # NCHW, scale_factor=2, align_corners=False
    return _upsample_axis_x2(_upsample_axis_x2(x, 2), 3)


@functools.partial(jax.jit, static_argnames=("act_dtype",))
def up_block_forward(inputs2, inputs1, params, act_dtype=jnp.bfloat16):
    """inputs2: (N, C_down, H2, W2); inputs1: (N, C_up, H1, W1); both NCHW f32."""
    results2 = bilinear_upsample_x2(inputs2)
    diff_w = results2.shape[-1] - inputs1.shape[-1]
    # Same implicit assumption as the PyTorch original; make it explicit.
    assert diff_w >= 0 and diff_w % 2 == 0, "spatial size difference must be even"
    p = diff_w // 2
    results1 = jnp.pad(inputs1, ((0, 0), (0, 0), (p, p), (p, p)))
    assert results1.shape[-2:] == results2.shape[-2:], (
        results1.shape, results2.shape)
    x = jnp.concatenate([results1, results2], axis=1).astype(jnp.float32)
    return _fused_conv_pallas(x, params["dwb"], params["pw"], params["b2"],
                              act_dtype=act_dtype)


# ---------------------------------------------------------------------------
# Deterministic parameters (BN in eval mode; scales folded into conv weights)
# ---------------------------------------------------------------------------
def init_params(key, in_channel_down, in_channel_up, out_channel):
    C = in_channel_down + in_channel_up
    Cout = out_channel
    ks = jax.random.split(key, 8)

    dw = 0.1 * jax.random.normal(ks[0], (C, 1, 3, 3), jnp.float32)   # depthwise
    g1 = 1.0 + 0.1 * jax.random.normal(ks[1], (C,), jnp.float32)
    be1 = 0.1 * jax.random.normal(ks[2], (C,), jnp.float32)
    m1 = 0.1 * jax.random.normal(ks[3], (C,), jnp.float32)
    v1 = jnp.abs(jax.random.normal(ks[4], (C,), jnp.float32)) + 0.5

    pw = 0.1 * jax.random.normal(ks[5], (Cout, C, 1, 1), jnp.float32)  # 1x1
    g2 = 1.0 + 0.1 * jax.random.normal(ks[6], (Cout,), jnp.float32)
    be2 = 0.1 * jax.random.normal(ks[7], (Cout,), jnp.float32)
    m2 = jnp.zeros((Cout,), jnp.float32)
    v2 = jnp.ones((Cout,), jnp.float32)

    s1 = g1 / jnp.sqrt(v1 + BN_EPS)
    sh1 = be1 - m1 * s1
    s2 = g2 / jnp.sqrt(v2 + BN_EPS)
    sh2 = be2 - m2 * s2

    # Kernel-ready layouts: BN scales folded into the (linear) conv weights;
    # depthwise taps (row-major kh,kw) + BN1 shift packed into one (C, 10)
    # array with channels on the sublane axis.
    dw_taps = dw.reshape(C, 9) * s1[:, None]                       # (C, 9)
    dwb = jnp.concatenate([dw_taps, sh1[:, None]], axis=1)         # (C, 10)
    pw_k = pw.reshape(Cout, C) * s2[:, None]                       # (Cout, C)

    folded = {"dwb": dwb, "pw": pw_k, "b2": sh2.reshape(Cout, 1)}
    raw = {"dw": dw, "g1": g1, "be1": be1, "m1": m1, "v1": v1,
           "pw": pw, "g2": g2, "be2": be2, "m2": m2, "v2": v2}
    return folded, raw


# ---------------------------------------------------------------------------
# Host (numpy) reference of the original PyTorch forward, for a sanity check
# ---------------------------------------------------------------------------
def _np_upsample_x2(x):
    def idx_w(L):
        dst = np.arange(2 * L, dtype=np.float32)
        src = np.maximum((dst + 0.5) * 0.5 - 0.5, 0.0)
        i0 = np.minimum(np.floor(src).astype(np.int32), L - 1)
        i1 = np.minimum(i0 + 1, L - 1)
        w1 = src - i0
        return i0, i1, 1.0 - w1, w1
    _, _, H, W = x.shape
    h0, h1, wh0, wh1 = idx_w(H)
    c0, c1, wc0, wc1 = idx_w(W)
    xh = (x[:, :, h0, :] * wh0[None, None, :, None]
          + x[:, :, h1, :] * wh1[None, None, :, None])
    return (xh[:, :, :, c0] * wc0[None, None, None, :]
            + xh[:, :, :, c1] * wc1[None, None, None, :])


def _np_reference(inputs2, inputs1, raw):
    x2 = _np_upsample_x2(np.asarray(inputs2, np.float32))
    x1 = np.asarray(inputs1, np.float32)
    p = (x2.shape[-1] - x1.shape[-1]) // 2
    x1 = np.pad(x1, ((0, 0), (0, 0), (p, p), (p, p)))
    x = np.concatenate([x1, x2], axis=1)
    N, C, H, W = x.shape
    xp = np.pad(x, ((0, 0), (0, 0), (1, 1), (1, 1)))
    dw = raw["dw"]
    z = np.zeros((N, C, H, W), np.float32)
    for kh in range(3):
        for kw in range(3):
            z += xp[:, :, kh:kh + H, kw:kw + W] * dw[None, :, 0, kh, kw, None, None]
    s1 = raw["g1"] / np.sqrt(raw["v1"] + BN_EPS)
    z = z * s1[None, :, None, None] + (raw["be1"] - raw["m1"] * s1)[None, :, None, None]
    z = np.where(z >= 0.0, z, LEAKY_SLOPE * z)
    pw = raw["pw"].reshape(raw["pw"].shape[0], C)
    y = np.einsum("oc,nchw->nohw", pw, z)
    s2 = raw["g2"] / np.sqrt(raw["v2"] + BN_EPS)
    y = y * s2[None, :, None, None] + (raw["be2"] - raw["m2"] * s2)[None, :, None, None]
    return y.astype(np.float32)


if __name__ == "__main__":
    key = jax.random.PRNGKey(0)
    k_p, k_x2, k_x1 = jax.random.split(key, 3)

    in_channel_down, in_channel_up, out_channel = 16, 16, 24

    # inputs2 (deep/low-res path): (N, C_down, 8, 8) -> upsampled to 16x16
    inputs2 = jax.random.normal(k_x2, (2, in_channel_down, 8, 8), jnp.float32)
    # inputs1 (skip path): (N, C_up, 14, 14) -> padded by 1 to 16x16
    inputs1 = jax.random.normal(k_x1, (2, in_channel_up, 14, 14), jnp.float32)

    params, raw = init_params(k_p, in_channel_down, in_channel_up, out_channel)

    # Primary (perf) path: bf16 activations / 1x1 weights, f32 accumulate.
    out_bf16 = jax.block_until_ready(
        up_block_forward(inputs2, inputs1, params, act_dtype=jnp.bfloat16))
    # Exact-semantics path: pure f32 end to end.
    out_f32 = jax.block_until_ready(
        up_block_forward(inputs2, inputs1, params, act_dtype=jnp.float32))

    assert out_bf16.shape == (2, out_channel, 16, 16), out_bf16.shape
    assert out_f32.shape == (2, out_channel, 16, 16), out_f32.shape

    raw_np = {k: np.asarray(v) for k, v in raw.items()}
    ref = _np_reference(np.asarray(inputs2), np.asarray(inputs1), raw_np)

    err_f32 = float(np.max(np.abs(np.asarray(out_f32) - ref)))
    err_bf16 = float(np.max(np.abs(np.asarray(out_bf16) - ref)))
    assert np.allclose(np.asarray(out_f32), ref, rtol=2e-3, atol=2e-3), err_f32
    assert np.allclose(np.asarray(out_bf16), ref, rtol=2e-2, atol=2e-2), err_bf16

    print("KERNEL_OK")
</pallas_src>

<mosaic_0001>
module attributes {stable_mosaic.version = 11 : i64} {
  func.func @_up_block_kernel(%arg0: i32, %arg1: memref<1x32x290xbf16, #tpu.memory_space<vmem>>, %arg2: memref<32x10xf32, #tpu.memory_space<vmem>>, %arg3: memref<24x32xbf16, #tpu.memory_space<vmem>>, %arg4: memref<24x1xf32, #tpu.memory_space<vmem>>, %arg5: memref<2x256xf32, #tpu.memory_space<vmem>>, %arg6: memref<1x24x256xf32, #tpu.memory_space<vmem>>) attributes {dimension_semantics = [#tpu.dimension_semantics<parallel>], iteration_bounds = array<i64: 2>, scalar_prefetch = 0 : i64, scratch_operands = 0 : i64, tpu.core_type = #tpu.core_type<tc>, window_params = [{transform_indices = @transform_0, window_bounds = array<i64: 1, 32, 290>}, {pipeline_mode = #tpu.pipeline_mode<synchronous>, transform_indices = @transform_1, window_bounds = array<i64: 32, 10>}, {pipeline_mode = #tpu.pipeline_mode<synchronous>, transform_indices = @transform_2, window_bounds = array<i64: 24, 32>}, {pipeline_mode = #tpu.pipeline_mode<synchronous>, transform_indices = @transform_3, window_bounds = array<i64: 24, 1>}, {pipeline_mode = #tpu.pipeline_mode<synchronous>, transform_indices = @transform_4, window_bounds = array<i64: 2, 256>}, {transform_indices = @transform_5, window_bounds = array<i64: 1, 24, 256>}]} {
    %c0 = arith.constant 0 : index
    %c0_0 = arith.constant 0 : index
    %0 = vector.load %arg2[%c0, %c0_0] : memref<32x10xf32, #tpu.memory_space<vmem>>, vector<32x10xf32>
    %c0_1 = arith.constant 0 : index
    %c0_2 = arith.constant 0 : index
    %1 = vector.load %arg5[%c0_1, %c0_2] : memref<2x256xf32, #tpu.memory_space<vmem>>, vector<2x256xf32>
    %c0_3 = arith.constant 0 : index
    %c0_4 = arith.constant 0 : index
    %c0_5 = arith.constant 0 : index
    %2 = vector.load %arg1[%c0_3, %c0_4, %c0_5] : memref<1x32x290xbf16, #tpu.memory_space<vmem>>, vector<1x32x256xbf16>
    %3 = vector.shape_cast %2 : vector<1x32x256xbf16> to vector<32x256xbf16>
    %4 = arith.extf %3 : vector<32x256xbf16> to vector<32x256xf32>
    %5 = vector.extract_strided_slice %1 {offsets = [0, 0], sizes = [1, 256], strides = [1, 1]} : vector<2x256xf32> to vector<1x256xf32>
    %6 = vector.broadcast %5 : vector<1x256xf32> to vector<32x256xf32>
    %7 = arith.mulf %4, %6 : vector<32x256xf32>
    %8 = vector.extract_strided_slice %0 {offsets = [0, 0], sizes = [32, 1], strides = [1, 1]} : vector<32x10xf32> to vector<32x1xf32>
    %9 = vector.broadcast %8 : vector<32x1xf32> to vector<32x256xf32>
    %10 = arith.mulf %7, %9 : vector<32x256xf32>
    %c0_6 = arith.constant 0 : index
    %c0_7 = arith.constant 0 : index
    %c1 = arith.constant 1 : index
    %11 = vector.load %arg1[%c0_6, %c0_7, %c1] : memref<1x32x290xbf16, #tpu.memory_space<vmem>>, vector<1x32x256xbf16>
    %12 = vector.shape_cast %11 : vector<1x32x256xbf16> to vector<32x256xbf16>
    %13 = arith.extf %12 : vector<32x256xbf16> to vector<32x256xf32>
    %14 = vector.extract_strided_slice %0 {offsets = [0, 1], sizes = [32, 1], strides = [1, 1]} : vector<32x10xf32> to vector<32x1xf32>
    %15 = vector.broadcast %14 : vector<32x1xf32> to vector<32x256xf32>
    %16 = arith.mulf %13, %15 : vector<32x256xf32>
    %17 = arith.addf %10, %16 : vector<32x256xf32>
    %c0_8 = arith.constant 0 : index
    %c0_9 = arith.constant 0 : index
    %c2 = arith.constant 2 : index
    %18 = vector.load %arg1[%c0_8, %c0_9, %c2] : memref<1x32x290xbf16, #tpu.memory_space<vmem>>, vector<1x32x256xbf16>
    %19 = vector.shape_cast %18 : vector<1x32x256xbf16> to vector<32x256xbf16>
    %20 = arith.extf %19 : vector<32x256xbf16> to vector<32x256xf32>
    %21 = vector.extract_strided_slice %1 {offsets = [1, 0], sizes = [1, 256], strides = [1, 1]} : vector<2x256xf32> to vector<1x256xf32>
    %22 = vector.broadcast %21 : vector<1x256xf32> to vector<32x256xf32>
    %23 = arith.mulf %20, %22 : vector<32x256xf32>
    %24 = vector.extract_strided_slice %0 {offsets = [0, 2], sizes = [32, 1], strides = [1, 1]} : vector<32x10xf32> to vector<32x1xf32>
    %25 = vector.broadcast %24 : vector<32x1xf32> to vector<32x256xf32>
    %26 = arith.mulf %23, %25 : vector<32x256xf32>
    %27 = arith.addf %17, %26 : vector<32x256xf32>
    %c0_10 = arith.constant 0 : index
    %c0_11 = arith.constant 0 : index
    %c16 = arith.constant 16 : index
    %28 = vector.load %arg1[%c0_10, %c0_11, %c16] : memref<1x32x290xbf16, #tpu.memory_space<vmem>>, vector<1x32x256xbf16>
    %29 = vector.shape_cast %28 : vector<1x32x256xbf16> to vector<32x256xbf16>
    %30 = arith.extf %29 : vector<32x256xbf16> to vector<32x256xf32>
    %31 = vector.extract_strided_slice %1 {offsets = [0, 0], sizes = [1, 256], strides = [1, 1]} : vector<2x256xf32> to vector<1x256xf32>
    %32 = vector.broadcast %31 : vector<1x256xf32> to vector<32x256xf32>
    %33 = arith.mulf %30, %32 : vector<32x256xf32>
    %34 = vector.extract_strided_slice %0 {offsets = [0, 3], sizes = [32, 1], strides = [1, 1]} : vector<32x10xf32> to vector<32x1xf32>
    %35 = vector.broadcast %34 : vector<32x1xf32> to vector<32x256xf32>
    %36 = arith.mulf %33, %35 : vector<32x256xf32>
    %37 = arith.addf %27, %36 : vector<32x256xf32>
    %c0_12 = arith.constant 0 : index
    %c0_13 = arith.constant 0 : index
    %c17 = arith.constant 17 : index
    %38 = vector.load %arg1[%c0_12, %c0_13, %c17] : memref<1x32x290xbf16, #tpu.memory_space<vmem>>, vector<1x32x256xbf16>
    %39 = vector.shape_cast %38 : vector<1x32x256xbf16> to vector<32x256xbf16>
    %40 = arith.extf %39 : vector<32x256xbf16> to vector<32x256xf32>
    %41 = vector.extract_strided_slice %0 {offsets = [0, 4], sizes = [32, 1], strides = [1, 1]} : vector<32x10xf32> to vector<32x1xf32>
    %42 = vector.broadcast %41 : vector<32x1xf32> to vector<32x256xf32>
    %43 = arith.mulf %40, %42 : vector<32x256xf32>
    %44 = arith.addf %37, %43 : vector<32x256xf32>
    %c0_14 = arith.constant 0 : index
    %c0_15 = arith.constant 0 : index
    %c18 = arith.constant 18 : index
    %45 = vector.load %arg1[%c0_14, %c0_15, %c18] : memref<1x32x290xbf16, #tpu.memory_space<vmem>>, vector<1x32x256xbf16>
    %46 = vector.shape_cast %45 : vector<1x32x256xbf16> to vector<32x256xbf16>
    %47 = arith.extf %46 : vector<32x256xbf16> to vector<32x256xf32>
    %48 = vector.extract_strided_slice %1 {offsets = [1, 0], sizes = [1, 256], strides = [1, 1]} : vector<2x256xf32> to vector<1x256xf32>
    %49 = vector.broadcast %48 : vector<1x256xf32> to vector<32x256xf32>
    %50 = arith.mulf %47, %49 : vector<32x256xf32>
    %51 = vector.extract_strided_slice %0 {offsets = [0, 5], sizes = [32, 1], strides = [1, 1]} : vector<32x10xf32> to vector<32x1xf32>
    %52 = vector.broadcast %51 : vector<32x1xf32> to vector<32x256xf32>
    %53 = arith.mulf %50, %52 : vector<32x256xf32>
    %54 = arith.addf %44, %53 : vector<32x256xf32>
    %c0_16 = arith.constant 0 : index
    %c0_17 = arith.constant 0 : index
    %c32 = arith.constant 32 : index
    %55 = vector.load %arg1[%c0_16, %c0_17, %c32] : memref<1x32x290xbf16, #tpu.memory_space<vmem>>, vector<1x32x256xbf16>
    %56 = vector.shape_cast %55 : vector<1x32x256xbf16> to vector<32x256xbf16>
    %57 = arith.extf %56 : vector<32x256xbf16> to vector<32x256xf32>
    %58 = vector.extract_strided_slice %1 {offsets = [0, 0], sizes = [1, 256], strides = [1, 1]} : vector<2x256xf32> to vector<1x256xf32>
    %59 = vector.broadcast %58 : vector<1x256xf32> to vector<32x256xf32>
    %60 = arith.mulf %57, %59 : vector<32x256xf32>
    %61 = vector.extract_strided_slice %0 {offsets = [0, 6], sizes = [32, 1], strides = [1, 1]} : vector<32x10xf32> to vector<32x1xf32>
    %62 = vector.broadcast %61 : vector<32x1xf32> to vector<32x256xf32>
    %63 = arith.mulf %60, %62 : vector<32x256xf32>
    %64 = arith.addf %54, %63 : vector<32x256xf32>
    %c0_18 = arith.constant 0 : index
    %c0_19 = arith.constant 0 : index
    %c33 = arith.constant 33 : index
    %65 = vector.load %arg1[%c0_18, %c0_19, %c33] : memref<1x32x290xbf16, #tpu.memory_space<vmem>>, vector<1x32x256xbf16>
    %66 = vector.shape_cast %65 : vector<1x32x256xbf16> to vector<32x256xbf16>
    %67 = arith.extf %66 : vector<32x256xbf16> to vector<32x256xf32>
    %68 = vector.extract_strided_slice %0 {offsets = [0, 7], sizes = [32, 1], strides = [1, 1]} : vector<32x10xf32> to vector<32x1xf32>
    %69 = vector.broadcast %68 : vector<32x1xf32> to vector<32x256xf32>
    %70 = arith.mulf %67, %69 : vector<32x256xf32>
    %71 = arith.addf %64, %70 : vector<32x256xf32>
    %c0_20 = arith.constant 0 : index
    %c0_21 = arith.constant 0 : index
    %c34 = arith.constant 34 : index
    %72 = vector.load %arg1[%c0_20, %c0_21, %c34] : memref<1x32x290xbf16, #tpu.memory_space<vmem>>, vector<1x32x256xbf16>
    %73 = vector.shape_cast %72 : vector<1x32x256xbf16> to vector<32x256xbf16>
    %74 = arith.extf %73 : vector<32x256xbf16> to vector<32x256xf32>
    %75 = vector.extract_strided_slice %1 {offsets = [1, 0], sizes = [1, 256], strides = [1, 1]} : vector<2x256xf32> to vector<1x256xf32>
    %76 = vector.broadcast %75 : vector<1x256xf32> to vector<32x256xf32>
    %77 = arith.mulf %74, %76 : vector<32x256xf32>
    %78 = vector.extract_strided_slice %0 {offsets = [0, 8], sizes = [32, 1], strides = [1, 1]} : vector<32x10xf32> to vector<32x1xf32>
    %79 = vector.broadcast %78 : vector<32x1xf32> to vector<32x256xf32>
    %80 = arith.mulf %77, %79 : vector<32x256xf32>
    %81 = arith.addf %71, %80 : vector<32x256xf32>
    %82 = vector.extract_strided_slice %0 {offsets = [0, 9], sizes = [32, 1], strides = [1, 1]} : vector<32x10xf32> to vector<32x1xf32>
    %83 = vector.broadcast %82 : vector<32x1xf32> to vector<32x256xf32>
    %84 = arith.addf %81, %83 : vector<32x256xf32>
    %cst = arith.constant 0.000000e+00 : f32
    %85 = vector.broadcast %cst : f32 to vector<32x256xf32>
    %86 = arith.cmpf oge, %84, %85 : vector<32x256xf32>
    %cst_22 = arith.constant 2.000000e-01 : f32
    %87 = vector.broadcast %cst_22 : f32 to vector<32x256xf32>
    %88 = arith.mulf %87, %84 : vector<32x256xf32>
    %89 = arith.select %86, %84, %88 : vector<32x256xi1>, vector<32x256xf32>
    %c0_23 = arith.constant 0 : index
    %c0_24 = arith.constant 0 : index
    %90 = vector.load %arg3[%c0_23, %c0_24] : memref<24x32xbf16, #tpu.memory_space<vmem>>, vector<24x32xbf16>
    %91 = arith.truncf %89 : vector<32x256xf32> to vector<32x256xbf16>
    %cst_25 = arith.constant dense<0.000000e+00> : vector<24x256xf32>
    %92 = tpu.matmul %90, %91, %cst_25 {dimension_numbers = #tpu.dot_dimension_numbers<[1], [0], [0], [1], [0, 0, 1, 1], [], []>} : vector<24x32xbf16>, vector<32x256xbf16>, vector<24x256xf32> -> vector<24x256xf32>
    %c0_26 = arith.constant 0 : index
    %c0_27 = arith.constant 0 : index
    %93 = vector.load %arg4[%c0_26, %c0_27] : memref<24x1xf32, #tpu.memory_space<vmem>>, vector<24x1xf32>
    %94 = vector.broadcast %93 : vector<24x1xf32> to vector<24x256xf32>
    %95 = arith.addf %92, %94 : vector<24x256xf32>
    %c0_28 = arith.constant 0 : index
    %c0_29 = arith.constant 0 : index
    %c0_30 = arith.constant 0 : index
    %96 = vector.load %arg6[%c0_28, %c0_29, %c0_30] : memref<1x24x256xf32, #tpu.memory_space<vmem>>, vector<1x24x256xf32>
    %97 = vector.shape_cast %96 : vector<1x24x256xf32> to vector<24x256xf32>
    %98 = vector.shape_cast %95 : vector<24x256xf32> to vector<1x24x256xf32>
    tpu.vector_store %arg6[%c0_28, %c0_29, %c0_30], %98 {strides = array<i32>} : memref<1x24x256xf32, #tpu.memory_space<vmem>>, vector<1x24x256xf32>,
    return
  }
  func.func @transform_0(%arg0: i32) -> (i32, i32, i32) {
    %c0_i32 = arith.constant 0 : i32
    %c0_i32_0 = arith.constant 0 : i32
    %c0_i32_1 = arith.constant 0 : i32
    return %arg0, %c0_i32, %c0_i32_0 : i32, i32, i32
  }
  func.func @transform_1(%arg0: i32) -> (i32, i32) {
    %c0_i32 = arith.constant 0 : i32
    %c0_i32_0 = arith.constant 0 : i32
    %c0_i32_1 = arith.constant 0 : i32
    return %c0_i32, %c0_i32_0 : i32, i32
  }
  func.func @transform_2(%arg0: i32) -> (i32, i32) {
    %c0_i32 = arith.constant 0 : i32
    %c0_i32_0 = arith.constant 0 : i32
    %c0_i32_1 = arith.constant 0 : i32
    return %c0_i32, %c0_i32_0 : i32, i32
  }
  func.func @transform_3(%arg0: i32) -> (i32, i32) {
    %c0_i32 = arith.constant 0 : i32
    %c0_i32_0 = arith.constant 0 : i32
    %c0_i32_1 = arith.constant 0 : i32
    return %c0_i32, %c0_i32_0 : i32, i32
  }
  func.func @transform_4(%arg0: i32) -> (i32, i32) {
    %c0_i32 = arith.constant 0 : i32
    %c0_i32_0 = arith.constant 0 : i32
    %c0_i32_1 = arith.constant 0 : i32
    return %c0_i32, %c0_i32_0 : i32, i32
  }
  func.func @transform_5(%arg0: i32) -> (i32, i32, i32) {
    %c0_i32 = arith.constant 0 : i32
    %c0_i32_0 = arith.constant 0 : i32
    %c0_i32_1 = arith.constant 0 : i32
    return %arg0, %c0_i32, %c0_i32_0 : i32, i32, i32
  }
}

</mosaic_0001>

<llo_original>
// kernel: up_block_forward.1
$region0: #{up_block_forward.1}
  #allocation0 [shape = 'u32[]', space=smem, size = 0x4, offset = 0x4, fixed_abs, tag = 'smem constant byte address 0x4 - core index']
  #allocation1 [shape = 'u32[144,128]{1,0:T(1,128)}', space=vmem, size = 0x12000, scoped, tag = 'internal scratch']
  %s0 = inlined_call_operand.vmem [shape: bf16[2,32,290], index: 0, kind: input, shape index: {}]
  %s1 = inlined_call_operand.vmem [shape: f32[32,10], index: 1, kind: input, shape index: {}]
  %s2 = inlined_call_operand.vmem [shape: bf16[24,32], index: 2, kind: input, shape index: {}]
  %s3 = inlined_call_operand.vmem [shape: f32[24,1], index: 3, kind: input, shape index: {}]
  %s4 = inlined_call_operand.vmem [shape: f32[2,256], index: 4, kind: input, shape index: {}]
  %s5 = inlined_call_operand.vmem [shape: f32[2,24,256], index: 5, kind: output, shape index: {}]
  %s6 = sld [smem:[#allocation0]]
  $region53: #{up_block_forward.1} parent=0
    _
  %s8 = ssub.s32 1, %s6
  %s9 = scalar_select 0, %s8, %s6
  loop: start=0, step=1, limit=4
  $region2: #{up_block_forward.1} parent=0 // loop_pre_header
    _
  $region3: #{up_block_forward.1} parent=0 // loop_header
    %s11 = sphi 0, %s15
    %p12 = scmp.ge.s32.totalorder %s11, 4
    %s21 = sphi 0, %s23
    %s24 = sphi 0, %s21
    %s25 = sphi 0, %s24
    %s41 = sphi 0, %s25
    %s45 = sphi 0, %s45
    %s47 = sphi 0, %s45
    %s48 = sphi 0, %s47
    %s62 = sphi 0, %s48
    %s66 = sphi 0, %s66
    %s68 = sphi 0, %s66
    %s69 = sphi 0, %s68
    %s83 = sphi 0, %s69
    %s87 = sphi 0, %s87
    %s89 = sphi 0, %s87
    %s90 = sphi 0, %s89
    %s104 = sphi 0, %s90
    %s108 = sphi 0, %s108
    %s110 = sphi 0, %s108
    %s111 = sphi 0, %s110
    %s125 = sphi 0, %s111
    %s131 = sphi 0, %s133
    %s134 = sphi 0, %s131
    %s135 = sphi 0, %s134
    %s151 = sphi 0, %s135
  $region4: #{up_block_forward.1} parent=0 // loop_header_branch
    %14 = sbr.rel (%p12) target = $region8
  $region5: #{up_block_forward.1} parent=0 // loop_body
    %s16 = ssub.s32 %s11, 1
    %s17 = ssub.s32 %s11, 2
    %s18 = sadd.s32 %s11, 1
    %s19 = ssub.s32 %s11, %s18
    %p20 = scmp.eq.s32.totalorder %s19, 0
    %s22 = sadd.s32 %s21, 1
    %s23 = scalar_select %p20, %s21, %s22
    %p26 = pneg %p20
    %p27 = scmp.eq.s32.totalorder %s11, 1
    %p28 = por %p26, %p27
    %p29 = scmp.ne.s32.totalorder %s21, %s24
    %p30 = scmp.eq.s32.totalorder %s11, 0
    %p31 = por %p29, %p30
    %p32 = scmp.ne.s32.totalorder %s21, %s24
    %p33 = scmp.eq.s32.totalorder %s16, 1
    %p34 = por %p32, %p33
    %p35 = scmp.ne.s32.totalorder %s24, %s25
    %p36 = scmp.eq.s32.totalorder %s16, 0
    %p37 = por %p35, %p36
    %p38 = scmp.ne.s32.totalorder %s24, %s25
    %p39 = scmp.eq.s32.totalorder %s17, 1
    %p40 = por %p38, %p39
    %p42 = scmp.ne.s32.totalorder %s25, %s41
    %p43 = scmp.eq.s32.totalorder %s17, 0
    %p44 = por %p42, %p43
    %s46 = sadd.s32 %s45, 1
    %p49 = scmp.eq.s32.totalorder %s11, 1
    %p50 = scmp.ne.s32.totalorder %s45, %s47
    %p51 = scmp.eq.s32.totalorder %s11, 0
    %p52 = por %p50, %p51
    %p53 = scmp.ne.s32.totalorder %s45, %s47
    %p54 = scmp.eq.s32.totalorder %s16, 1
    %p55 = por %p53, %p54
    %p56 = scmp.ne.s32.totalorder %s47, %s48
    %p57 = scmp.eq.s32.totalorder %s16, 0
    %p58 = por %p56, %p57
    %p59 = scmp.ne.s32.totalorder %s47, %s48
    %p60 = scmp.eq.s32.totalorder %s17, 1
    %p61 = por %p59, %p60
    %p63 = scmp.ne.s32.totalorder %s48, %s62
    %p64 = scmp.eq.s32.totalorder %s17, 0
    %p65 = por %p63, %p64
    %s67 = sadd.s32 %s66, 1
    %p70 = scmp.eq.s32.totalorder %s11, 1
    %p71 = scmp.ne.s32.totalorder %s66, %s68
    %p72 = scmp.eq.s32.totalorder %s11, 0
    %p73 = por %p71, %p72
    %p74 = scmp.ne.s32.totalorder %s66, %s68
    %p75 = scmp.eq.s32.totalorder %s16, 1
    %p76 = por %p74, %p75
    %p77 = scmp.ne.s32.totalorder %s68, %s69
    %p78 = scmp.eq.s32.totalorder %s16, 0
    %p79 = por %p77, %p78
    %p80 = scmp.ne.s32.totalorder %s68, %s69
    %p81 = scmp.eq.s32.totalorder %s17, 1
    %p82 = por %p80, %p81
    %p84 = scmp.ne.s32.totalorder %s69, %s83
    %p85 = scmp.eq.s32.totalorder %s17, 0
    %p86 = por %p84, %p85
    %s88 = sadd.s32 %s87, 1
    %p91 = scmp.eq.s32.totalorder %s11, 1
    %p92 = scmp.ne.s32.totalorder %s87, %s89
    %p93 = scmp.eq.s32.totalorder %s11, 0
    %p94 = por %p92, %p93
    %p95 = scmp.ne.s32.totalorder %s87, %s89
    %p96 = scmp.eq.s32.totalorder %s16, 1
    %p97 = por %p95, %p96
    %p98 = scmp.ne.s32.totalorder %s89, %s90
    %p99 = scmp.eq.s32.totalorder %s16, 0
    %p100 = por %p98, %p99
    %p101 = scmp.ne.s32.totalorder %s89, %s90
    %p102 = scmp.eq.s32.totalorder %s17, 1
    %p103 = por %p101, %p102
    %p105 = scmp.ne.s32.totalorder %s90, %s104
    %p106 = scmp.eq.s32.totalorder %s17, 0
    %p107 = por %p105, %p106
    %s109 = sadd.s32 %s108, 1
    %p112 = scmp.eq.s32.totalorder %s11, 1
    %p113 = scmp.ne.s32.totalorder %s108, %s110
    %p114 = scmp.eq.s32.totalorder %s11, 0
    %p115 = por %p113, %p114
    %p116 = scmp.ne.s32.totalorder %s108, %s110
    %p117 = scmp.eq.s32.totalorder %s16, 1
    %p118 = por %p116, %p117
    %p119 = scmp.ne.s32.totalorder %s110, %s111
    %p120 = scmp.eq.s32.totalorder %s16, 0
    %p121 = por %p119, %p120
    %p122 = scmp.ne.s32.totalorder %s110, %s111
    %p123 = scmp.eq.s32.totalorder %s17, 1
    %p124 = por %p122, %p123
    %p126 = scmp.ne.s32.totalorder %s111, %s125
    %p127 = scmp.eq.s32.totalorder %s17, 0
    %p128 = por %p126, %p127
    %s129 = ssub.s32 %s11, %s18
    %p130 = scmp.eq.s32.totalorder %s129, 0
    %s132 = sadd.s32 %s131, 1
    %s133 = scalar_select %p130, %s131, %s132
    %p136 = pneg %p130
    %p137 = scmp.eq.s32.totalorder %s11, 1
    %p138 = por %p136, %p137
    %p139 = scmp.ne.s32.totalorder %s131, %s134
    %p140 = scmp.eq.s32.totalorder %s11, 0
    %p141 = por %p139, %p140
    %p142 = scmp.ne.s32.totalorder %s131, %s134
    %p143 = scmp.eq.s32.totalorder %s16, 1
    %p144 = por %p142, %p143
    %p145 = scmp.ne.s32.totalorder %s134, %s135
    %p146 = scmp.eq.s32.totalorder %s16, 0
    %p147 = por %p145, %p146
    %p148 = scmp.ne.s32.totalorder %s134, %s135
    %p149 = scmp.eq.s32.totalorder %s17, 1
    %p150 = por %p148, %p149
    %p152 = scmp.ne.s32.totalorder %s135, %s151
    %p153 = scmp.eq.s32.totalorder %s17, 0
    %p154 = por %p152, %p153
    %p155 = scmp.le.s32.totalorder 1, %s11
    %p156 = scmp.lt.s32.totalorder %s11, 3
    %p157 = pnand %p155, %p156
    %p158 = pneg %p157
    // Predicated region
    $region9: #{up_block_forward.1} parent=5 // pred_check
      _
    $region10: #{up_block_forward.1} parent=5 // pred_check_branch
      %160 = sbr.rel (%p157) target = $region12
    $region11: #{up_block_forward.1} parent=5 // pred_region
      %s161 = ssub.s32 %s11, 1
      // Predicated region
      $region13: #{up_block_forward.1} parent=11 // pred_check
        %p162 = pneg %p58
      $region14: #{up_block_forward.1} parent=11 // pred_check_branch
        %164 = sbr.rel (%p162) target = $region16
      $region15: #{up_block_forward.1} parent=11 // pred_region
        _
      $region16: #{up_block_forward.1} parent=11 // pred_fallthru
        _
      // Predicated region
      $region17: #{up_block_forward.1} parent=11 // pred_check
        %p165 = pneg %p79
      $region18: #{up_block_forward.1} parent=11 // pred_check_branch
        %167 = sbr.rel (%p165) target = $region20
      $region19: #{up_block_forward.1} parent=11 // pred_region
        _
      $region20: #{up_block_forward.1} parent=11 // pred_fallthru
        _
      // Predicated region
      $region21: #{up_block_forward.1} parent=11 // pred_check
        %p168 = pneg %p100
      $region22: #{up_block_forward.1} parent=11 // pred_check_branch
        %170 = sbr.rel (%p168) target = $region24
      $region23: #{up_block_forward.1} parent=11 // pred_region
        _
      $region24: #{up_block_forward.1} parent=11 // pred_fallthru
        _
      // Predicated region
      $region25: #{up_block_forward.1} parent=11 // pred_check
        %p171 = pneg %p121
      $region26: #{up_block_forward.1} parent=11 // pred_check_branch
        %173 = sbr.rel (%p171) target = $region28
      $region27: #{up_block_forward.1} parent=11 // pred_region
        _
      $region28: #{up_block_forward.1} parent=11 // pred_fallthru
        _
    $region12: #{up_block_forward.1} parent=5 // pred_fallthru
      _
    %p174 = scmp.lt.s32.totalorder %s11, 2
    // Predicated region
    $region29: #{up_block_forward.1} parent=5 // pred_check
      %p175 = pneg %p174
    $region30: #{up_block_forward.1} parent=5 // pred_check_branch
      %177 = sbr.rel (%p175) target = $region32
    $region31: #{up_block_forward.1} parent=5 // pred_region
      // Predicated region
      $region33: #{up_block_forward.1} parent=31 // pred_check
        %p178 = pneg %p31
      $region34: #{up_block_forward.1} parent=31 // pred_check_branch
        %180 = sbr.rel (%p178) target = $region36
      $region35: #{up_block_forward.1} parent=31 // pred_region
        %p181 = scmp.lt.s32.totalorder %s11, 1
        %s182 = scalar_select %p181, %s11, 1
        %s183 = smul.addr %s182, 12
        %s184 = smul.addr %s183, 4
        %s185 = scalar_lea.vmem %s0, %s184
      $region36: #{up_block_forward.1} parent=31 // pred_fallthru
        _
    $region32: #{up_block_forward.1} parent=5 // pred_fallthru
      _
    %p186 = scmp.le.s32.totalorder 1, %s11
    %p187 = scmp.lt.s32.totalorder %s11, 3
    %p188 = pnand %p186, %p187
    %p189 = pneg %p188
    // Predicated region
    $region37: #{up_block_forward.1} parent=5 // pred_check
      _
    $region38: #{up_block_forward.1} parent=5 // pred_check_branch
      %191 = sbr.rel (%p188) target = $region40
    $region39: #{up_block_forward.1} parent=5 // pred_region
      %s192 = ssub.s32 %s11, 1
      %p193 = scmp.lt.s32.totalorder %s16, 1
      %s194 = scalar_select %p193, %s16, 1
      %s195 = smul.addr %s194, 12
      %s196 = smul.addr %s195, 4
      %s197 = scalar_lea.vmem %s0, %s196
      %p198 = pneg %p37
      %p199 = pneg %p34
      %p200 = pneg %p58
      %p201 = pneg %p55
      %p202 = pneg %p79
      %p203 = pneg %p76
      %p204 = pneg %p100
      %p205 = pneg %p97
      %p206 = pneg %p121
      %p207 = pneg %p118
      %p208 = pneg %p147
      %p209 = pneg %p144
      %p210 = scmp.lt.s32.totalorder %s16, 1
      %s211 = scalar_select %p210, %s16, 1
      %s212 = smul.addr %s211, 6
      %s213 = smul.addr %s212, 8
      %s214 = scalar_lea.vmem %s5, %s213
      %p215 = scmp.lt.s32.totalorder %s16, 1
      %s216 = scalar_select %p215, %s16, 1
      %s217 = smul.addr %s216, 12
      %s218 = smul.addr %s217, 4
      %s219 = scalar_lea.vmem %s0, %s218
      %p220 = scmp.lt.s32.totalorder %s16, 1
      %s221 = scalar_select %p220, %s16, 1
      %s222 = smul.addr %s221, 6
      %s223 = smul.addr %s222, 8
      %s224 = scalar_lea.vmem %s5, %s223
      %v226 = vld [vmem:[%s1] sm:$0xff]
      %v227 = vld [vmem:[%s1 + $0x8] sm:$0xff]
      %v228 = vld [vmem:[%s1 + $0x10] sm:$0xff]
      %v229 = vld [vmem:[%s1 + $0x18] sm:$0xff]
      %v230 = vld [vmem:[%s4] sm:$0xf]
      %v231 = vld [vmem:[%s219] sm:$0xff]
      %v232 = vld [vmem:[%s219 + $0xc] sm:$0xff]
      %v233 = vld [vmem:[%s219 + $0x18] sm:$0xff]
      %v234 = vld [vmem:[%s219 + $0x24] sm:$0xff]
      %v235 = vunpack.c.l.bf16 %v231
      %v236 = vunpack.c.h.bf16 %v231
      %v237 = vunpack.c.l.bf16 %v232
      %v238 = vunpack.c.h.bf16 %v232
      %v239 = vunpack.c.l.bf16 %v233
      %v240 = vunpack.c.h.bf16 %v233
      %v241 = vunpack.c.l.bf16 %v234
      %v242 = vunpack.c.h.bf16 %v234
      %v244 = vlaneseq
      %v245 = vshrl.u32 %v244, 7
      %v246 = vsub.s32 0, %v245
      %v247 = vrot.slane %v230, %v246
      %v248 = vlaneseq
      %v249 = vshrl.u32 %v248, 7
      %v250 = vsub.s32 2, %v249
      %v251 = vrot.slane %v230, %v250
      %v254 = vlaneseq
      %v255 = vshrl.u32 %v254, 7
      %v256 = vsub.s32 0, %v255
      %v257 = vrot.slane %v247, %v256
      %v258 = vlaneseq
      %v259 = vshrl.u32 %v258, 7
      %v260 = vsub.s32 0, %v259
      %v261 = vrot.slane %v251, %v260
      %v262 = vmul.f32 %v235, %v257
      %v263 = vmul.f32 %v236, %v261
      %v264 = vmul.f32 %v237, %v257
      %v265 = vmul.f32 %v238, %v261
      %v266 = vmul.f32 %v239, %v257
      %v267 = vmul.f32 %v240, %v261
      %v268 = vmul.f32 %v241, %v257
      %v269 = vmul.f32 %v242, %v261
      %271 = vset.pattern.permute.xlu0 0
      %272 = vperm.xlu0 %271, %v226
      %v273 = vpop.permute.xlu0 %272
      %276 = vset.pattern.permute.xlu0 0
      %277 = vperm.xlu0 %276, %v227
      %v278 = vpop.permute.xlu0 %277
      %281 = vset.pattern.permute.xlu0 0
      %282 = vperm.xlu0 %281, %v228
      %v283 = vpop.permute.xlu0 %282
      %286 = vset.pattern.permute.xlu0 0
      %287 = vperm.xlu0 %286, %v229
      %v288 = vpop.permute.xlu0 %287
      %v290 = vmul.f32 %v262, %v273
      %v291 = vmul.f32 %v263, %v273
      %v292 = vmul.f32 %v264, %v278
      %v293 = vmul.f32 %v265, %v278
      %v294 = vmul.f32 %v266, %v283
      %v295 = vmul.f32 %v267, %v283
      %v296 = vmul.f32 %v268, %v288
      %v297 = vmul.f32 %v269, %v288
      %v298 = vld [vmem:[%s219] sm:$0xff]
      %v299 = vld [vmem:[%s219 + $0x8] sm:$0xf]
      %v300 = vld [vmem:[%s219 + $0xc] sm:$0xff]
      %v301 = vld [vmem:[%s219 + $0x14] sm:$0xf]
      %v302 = vld [vmem:[%s219 + $0x18] sm:$0xff]
      %v303 = vld [vmem:[%s219 + $0x20] sm:$0xf]
      %v304 = vld [vmem:[%s219 + $0x24] sm:$0xff]
      %v305 = vld [vmem:[%s219 + $0x2c] sm:$0xf]
      %v306 = vunpack.c.l.bf16 %v298
      %v307 = vunpack.c.h.bf16 %v298
      %v308 = vunpack.c.l.bf16 %v299
      %v309 = vunpack.c.l.bf16 %v300
      %v310 = vunpack.c.h.bf16 %v300
      %v311 = vunpack.c.l.bf16 %v301
      %v312 = vunpack.c.l.bf16 %v302
      %v313 = vunpack.c.h.bf16 %v302
      %v314 = vunpack.c.l.bf16 %v303
      %v315 = vunpack.c.l.bf16 %v304
      %v316 = vunpack.c.h.bf16 %v304
      %v317 = vunpack.c.l.bf16 %v305
      %318 = vset.pattern.permute.xlu0 1
      %319 = vperm.xlu0 %318, %v226
      %v320 = vpop.permute.xlu0 %319
      %322 = vset.pattern.permute.xlu0 1
      %323 = vperm.xlu0 %322, %v227
      %v324 = vpop.permute.xlu0 %323
      %326 = vset.pattern.permute.xlu0 1
      %327 = vperm.xlu0 %326, %v228
      %v328 = vpop.permute.xlu0 %327
      %330 = vset.pattern.permute.xlu0 1
      %331 = vperm.xlu0 %330, %v229
      %v332 = vpop.permute.xlu0 %331
      %v334 = vmul.f32 %v306, %v320
      %v335 = vmul.f32 %v307, %v320
      %v336 = vmul.f32 %v308, %v320
      %v337 = vmul.f32 %v309, %v324
      %v338 = vmul.f32 %v310, %v324
      %v339 = vmul.f32 %v311, %v324
      %v340 = vmul.f32 %v312, %v328
      %v341 = vmul.f32 %v313, %v328
      %v342 = vmul.f32 %v314, %v328
      %v343 = vmul.f32 %v315, %v332
      %v344 = vmul.f32 %v316, %v332
      %v345 = vmul.f32 %v317, %v332
      %358 = vrot.lane.b32.xlu0 %v334, 127
      %v359 = vpop.permute.xlu0 %358
      %360 = vrot.lane.b32.xlu0 %v335, 127
      %v361 = vpop.permute.xlu0 %360
      %362 = vrot.lane.b32.xlu0 %v336, 127
      %v363 = vpop.permute.xlu0 %362
      %364 = vrot.lane.b32.xlu0 %v337, 127
      %v365 = vpop.permute.xlu0 %364
      %366 = vrot.lane.b32.xlu0 %v338, 127
      %v367 = vpop.permute.xlu0 %366
      %368 = vrot.lane.b32.xlu0 %v339, 127
      %v369 = vpop.permute.xlu0 %368
      %370 = vrot.lane.b32.xlu0 %v340, 127
      %v371 = vpop.permute.xlu0 %370
      %372 = vrot.lane.b32.xlu0 %v341, 127
      %v373 = vpop.permute.xlu0 %372
      %374 = vrot.lane.b32.xlu0 %v342, 127
      %v375 = vpop.permute.xlu0 %374
      %376 = vrot.lane.b32.xlu0 %v343, 127
      %v377 = vpop.permute.xlu0 %376
      %378 = vrot.lane.b32.xlu0 %v344, 127
      %v379 = vpop.permute.xlu0 %378
      %380 = vrot.lane.b32.xlu0 %v345, 127
      %v381 = vpop.permute.xlu0 %380
      %vm382 = vcmask 1039360
      %v383 = vsel %vm382, %v359, %v361
      %v384 = vsel %vm382, %v361, %v363
      %v385 = vsel %vm382, %v365, %v367
      %v386 = vsel %vm382, %v367, %v369
      %v387 = vsel %vm382, %v371, %v373
      %v388 = vsel %vm382, %v373, %v375
      %v389 = vsel %vm382, %v377, %v379
      %v390 = vsel %vm382, %v379, %v381
      %v399 = vadd.f32 %v290, %v383
      %v400 = vadd.f32 %v291, %v384
      %v401 = vadd.f32 %v292, %v385
      %v402 = vadd.f32 %v293, %v386
      %v403 = vadd.f32 %v294, %v387
      %v404 = vadd.f32 %v295, %v388
      %v405 = vadd.f32 %v296, %v389
      %v406 = vadd.f32 %v297, %v390
      %v407 = vlaneseq
      %v408 = vshrl.u32 %v407, 7
      %v409 = vsub.s32 1, %v408
      %v410 = vrot.slane %v230, %v409
      %v411 = vlaneseq
      %v412 = vshrl.u32 %v411, 7
      %v413 = vsub.s32 3, %v412
      %v414 = vrot.slane %v230, %v413
      %v417 = vlaneseq
      %v418 = vshrl.u32 %v417, 7
      %v419 = vsub.s32 1, %v418
      %v420 = vrot.slane %v410, %v419
      %v421 = vlaneseq
      %v422 = vshrl.u32 %v421, 7
      %v423 = vsub.s32 1, %v422
      %v424 = vrot.slane %v414, %v423
      %427 = vrot.lane.b32.xlu0 %v420, 2
      %v428 = vpop.permute.xlu0 %427
      %429 = vrot.lane.b32.xlu0 %v424, 2
      %v430 = vpop.permute.xlu0 %429
      %vm431 = vcmask 15360
      %v432 = vsel %vm431, %v428, %v430
      %v436 = vmul.f32 %v306, %v428
      %v437 = vmul.f32 %v307, %v432
      %v438 = vmul.f32 %v308, %v430
      %v439 = vmul.f32 %v309, %v428
      %v440 = vmul.f32 %v310, %v432
      %v441 = vmul.f32 %v311, %v430
      %v442 = vmul.f32 %v312, %v428
      %v443 = vmul.f32 %v313, %v432
      %v444 = vmul.f32 %v314, %v430
      %v445 = vmul.f32 %v315, %v428
      %v446 = vmul.f32 %v316, %v432
      %v447 = vmul.f32 %v317, %v430
      %448 = vset.pattern.permute.xlu0 2
      %449 = vperm.xlu0 %448, %v226
      %v450 = vpop.permute.xlu0 %449
      %452 = vset.pattern.permute.xlu0 2
      %453 = vperm.xlu0 %452, %v227
      %v454 = vpop.permute.xlu0 %453
      %456 = vset.pattern.permute.xlu0 2
      %457 = vperm.xlu0 %456, %v228
      %v458 = vpop.permute.xlu0 %457
      %460 = vset.pattern.permute.xlu0 2
      %461 = vperm.xlu0 %460, %v229
      %v462 = vpop.permute.xlu0 %461
      %v464 = vmul.f32 %v436, %v450
      %v465 = vmul.f32 %v437, %v450
      %v466 = vmul.f32 %v438, %v450
      %v467 = vmul.f32 %v439, %v454
      %v468 = vmul.f32 %v440, %v454
      %v469 = vmul.f32 %v441, %v454
      %v470 = vmul.f32 %v442, %v458
      %v471 = vmul.f32 %v443, %v458
      %v472 = vmul.f32 %v444, %v458
      %v473 = vmul.f32 %v445, %v462
      %v474 = vmul.f32 %v446, %v462
      %v475 = vmul.f32 %v447, %v462
      %488 = vrot.lane.b32.xlu0 %v464, 126
      %v489 = vpop.permute.xlu0 %488
      %490 = vrot.lane.b32.xlu0 %v465, 126
      %v491 = vpop.permute.xlu0 %490
      %492 = vrot.lane.b32.xlu0 %v466, 126
      %v493 = vpop.permute.xlu0 %492
      %494 = vrot.lane.b32.xlu0 %v467, 126
      %v495 = vpop.permute.xlu0 %494
      %496 = vrot.lane.b32.xlu0 %v468, 126
      %v497 = vpop.permute.xlu0 %496
      %498 = vrot.lane.b32.xlu0 %v469, 126
      %v499 = vpop.permute.xlu0 %498
      %500 = vrot.lane.b32.xlu0 %v470, 126
      %v501 = vpop.permute.xlu0 %500
      %502 = vrot.lane.b32.xlu0 %v471, 126
      %v503 = vpop.permute.xlu0 %502
      %504 = vrot.lane.b32.xlu0 %v472, 126
      %v505 = vpop.permute.xlu0 %504
      %506 = vrot.lane.b32.xlu0 %v473, 126
      %v507 = vpop.permute.xlu0 %506
      %508 = vrot.lane.b32.xlu0 %v474, 126
      %v509 = vpop.permute.xlu0 %508
      %510 = vrot.lane.b32.xlu0 %v475, 126
      %v511 = vpop.permute.xlu0 %510
      %vm512 = vcmask 1031168
      %v513 = vsel %vm512, %v489, %v491
      %v514 = vsel %vm512, %v491, %v493
      %v515 = vsel %vm512, %v495, %v497
      %v516 = vsel %vm512, %v497, %v499
      %v517 = vsel %vm512, %v501, %v503
      %v518 = vsel %vm512, %v503, %v505
      %v519 = vsel %vm512, %v507, %v509
      %v520 = vsel %vm512, %v509, %v511
      %v529 = vadd.f32 %v399, %v513
      %v530 = vadd.f32 %v400, %v514
      %v531 = vadd.f32 %v401, %v515
      %v532 = vadd.f32 %v402, %v516
      %v533 = vadd.f32 %v403, %v517
      %v534 = vadd.f32 %v404, %v518
      %v535 = vadd.f32 %v405, %v519
      %v536 = vadd.f32 %v406, %v520
      %539 = vrot.lane.b32.xlu0 %v257, 16
      %v540 = vpop.permute.xlu0 %539
      %541 = vrot.lane.b32.xlu0 %v261, 16
      %v542 = vpop.permute.xlu0 %541
      %vm543 = vcmask 130048
      %v544 = vsel %vm543, %v540, %v542
      %v548 = vmul.f32 %v306, %v540
      %v549 = vmul.f32 %v307, %v544
      %v550 = vmul.f32 %v308, %v542
      %v551 = vmul.f32 %v309, %v540
      %v552 = vmul.f32 %v310, %v544
      %v553 = vmul.f32 %v311, %v542
      %v554 = vmul.f32 %v312, %v540
      %v555 = vmul.f32 %v313, %v544
      %v556 = vmul.f32 %v314, %v542
      %v557 = vmul.f32 %v315, %v540
      %v558 = vmul.f32 %v316, %v544
      %v559 = vmul.f32 %v317, %v542
      %560 = vset.pattern.permute.xlu0 3
      %561 = vperm.xlu0 %560, %v226
      %v562 = vpop.permute.xlu0 %561
      %564 = vset.pattern.permute.xlu0 3
      %565 = vperm.xlu0 %564, %v227
      %v566 = vpop.permute.xlu0 %565
      %568 = vset.pattern.permute.xlu0 3
      %569 = vperm.xlu0 %568, %v228
      %v570 = vpop.permute.xlu0 %569
      %572 = vset.pattern.permute.xlu0 3
      %573 = vperm.xlu0 %572, %v229
      %v574 = vpop.permute.xlu0 %573
      %v576 = vmul.f32 %v548, %v562
      %v577 = vmul.f32 %v549, %v562
      %v578 = vmul.f32 %v550, %v562
      %v579 = vmul.f32 %v551, %v566
      %v580 = vmul.f32 %v552, %v566
      %v581 = vmul.f32 %v553, %v566
      %v582 = vmul.f32 %v554, %v570
      %v583 = vmul.f32 %v555, %v570
      %v584 = vmul.f32 %v556, %v570
      %v585 = vmul.f32 %v557, %v574
      %v586 = vmul.f32 %v558, %v574
      %v587 = vmul.f32 %v559, %v574
      %600 = vrot.lane.b32.xlu0 %v576, 112
      %v601 = vpop.permute.xlu0 %600
      %602 = vrot.lane.b32.xlu0 %v577, 112
      %v603 = vpop.permute.xlu0 %602
      %604 = vrot.lane.b32.xlu0 %v578, 112
      %v605 = vpop.permute.xlu0 %604
      %606 = vrot.lane.b32.xlu0 %v579, 112
      %v607 = vpop.permute.xlu0 %606
      %608 = vrot.lane.b32.xlu0 %v580, 112
      %v609 = vpop.permute.xlu0 %608
      %610 = vrot.lane.b32.xlu0 %v581, 112
      %v611 = vpop.permute.xlu0 %610
      %612 = vrot.lane.b32.xlu0 %v582, 112
      %v613 = vpop.permute.xlu0 %612
      %614 = vrot.lane.b32.xlu0 %v583, 112
      %v615 = vpop.permute.xlu0 %614
      %616 = vrot.lane.b32.xlu0 %v584, 112
      %v617 = vpop.permute.xlu0 %616
      %618 = vrot.lane.b32.xlu0 %v585, 112
      %v619 = vpop.permute.xlu0 %618
      %620 = vrot.lane.b32.xlu0 %v586, 112
      %v621 = vpop.permute.xlu0 %620
      %622 = vrot.lane.b32.xlu0 %v587, 112
      %v623 = vpop.permute.xlu0 %622
      %vm624 = vcmask 916480
      %v625 = vsel %vm624, %v601, %v603
      %v626 = vsel %vm624, %v603, %v605
      %v627 = vsel %vm624, %v607, %v609
      %v628 = vsel %vm624, %v609, %v611
      %v629 = vsel %vm624, %v613, %v615
      %v630 = vsel %vm624, %v615, %v617
      %v631 = vsel %vm624, %v619, %v621
      %v632 = vsel %vm624, %v621, %v623
      %v641 = vadd.f32 %v529, %v625
      %v642 = vadd.f32 %v530, %v626
      %v643 = vadd.f32 %v531, %v627
      %v644 = vadd.f32 %v532, %v628
      %v645 = vadd.f32 %v533, %v629
      %v646 = vadd.f32 %v534, %v630
      %v647 = vadd.f32 %v535, %v631
      %v648 = vadd.f32 %v536, %v632
      %649 = vset.pattern.permute.xlu0 4
      %650 = vperm.xlu0 %649, %v226
      %v651 = vpop.permute.xlu0 %650
      %653 = vset.pattern.permute.xlu0 4
      %654 = vperm.xlu0 %653, %v227
      %v655 = vpop.permute.xlu0 %654
      %657 = vset.pattern.permute.xlu0 4
      %658 = vperm.xlu0 %657, %v228
      %v659 = vpop.permute.xlu0 %658
      %661 = vset.pattern.permute.xlu0 4
      %662 = vperm.xlu0 %661, %v229
      %v663 = vpop.permute.xlu0 %662
      %v665 = vmul.f32 %v306, %v651
      %v666 = vmul.f32 %v307, %v651
      %v667 = vmul.f32 %v308, %v651
      %v668 = vmul.f32 %v309, %v655
      %v669 = vmul.f32 %v310, %v655
      %v670 = vmul.f32 %v311, %v655
      %v671 = vmul.f32 %v312, %v659
      %v672 = vmul.f32 %v313, %v659
      %v673 = vmul.f32 %v314, %v659
      %v674 = vmul.f32 %v315, %v663
      %v675 = vmul.f32 %v316, %v663
      %v676 = vmul.f32 %v317, %v663
      %689 = vrot.lane.b32.xlu0 %v665, 111
      %v690 = vpop.permute.xlu0 %689
      %691 = vrot.lane.b32.xlu0 %v666, 111
      %v692 = vpop.permute.xlu0 %691
      %693 = vrot.lane.b32.xlu0 %v667, 111
      %v694 = vpop.permute.xlu0 %693
      %695 = vrot.lane.b32.xlu0 %v668, 111
      %v696 = vpop.permute.xlu0 %695
      %697 = vrot.lane.b32.xlu0 %v669, 111
      %v698 = vpop.permute.xlu0 %697
      %699 = vrot.lane.b32.xlu0 %v670, 111
      %v700 = vpop.permute.xlu0 %699
      %701 = vrot.lane.b32.xlu0 %v671, 111
      %v702 = vpop.permute.xlu0 %701
      %703 = vrot.lane.b32.xlu0 %v672, 111
      %v704 = vpop.permute.xlu0 %703
      %705 = vrot.lane.b32.xlu0 %v673, 111
      %v706 = vpop.permute.xlu0 %705
      %707 = vrot.lane.b32.xlu0 %v674, 111
      %v708 = vpop.permute.xlu0 %707
      %709 = vrot.lane.b32.xlu0 %v675, 111
      %v710 = vpop.permute.xlu0 %709
      %711 = vrot.lane.b32.xlu0 %v676, 111
      %v712 = vpop.permute.xlu0 %711
      %vm713 = vcmask 908288
      %v714 = vsel %vm713, %v690, %v692
      %v715 = vsel %vm713, %v692, %v694
      %v716 = vsel %vm713, %v696, %v698
      %v717 = vsel %vm713, %v698, %v700
      %v718 = vsel %vm713, %v702, %v704
      %v719 = vsel %vm713, %v704, %v706
      %v720 = vsel %vm713, %v708, %v710
      %v721 = vsel %vm713, %v710, %v712
      %v730 = vadd.f32 %v641, %v714
      %v731 = vadd.f32 %v642, %v715
      %v732 = vadd.f32 %v643, %v716
      %v733 = vadd.f32 %v644, %v717
      %v734 = vadd.f32 %v645, %v718
      %v735 = vadd.f32 %v646, %v719
      %v736 = vadd.f32 %v647, %v720
      %v737 = vadd.f32 %v648, %v721
      %738 = vrot.lane.b32.xlu0 %v420, 18
      %v739 = vpop.permute.xlu0 %738
      %740 = vrot.lane.b32.xlu0 %v424, 18
      %v741 = vpop.permute.xlu0 %740
      %vm742 = vcmask 146432
      %v743 = vsel %vm742, %v739, %v741
      %v747 = vmul.f32 %v306, %v739
      %v748 = vmul.f32 %v307, %v743
      %v749 = vmul.f32 %v308, %v741
      %v750 = vmul.f32 %v309, %v739
      %v751 = vmul.f32 %v310, %v743
      %v752 = vmul.f32 %v311, %v741
      %v753 = vmul.f32 %v312, %v739
      %v754 = vmul.f32 %v313, %v743
      %v755 = vmul.f32 %v314, %v741
      %v756 = vmul.f32 %v315, %v739
      %v757 = vmul.f32 %v316, %v743
      %v758 = vmul.f32 %v317, %v741
      %759 = vset.pattern.permute.xlu0 5
      %760 = vperm.xlu0 %759, %v226
      %v761 = vpop.permute.xlu0 %760
      %763 = vset.pattern.permute.xlu0 5
      %764 = vperm.xlu0 %763, %v227
      %v765 = vpop.permute.xlu0 %764
      %767 = vset.pattern.permute.xlu0 5
      %768 = vperm.xlu0 %767, %v228
      %v769 = vpop.permute.xlu0 %768
      %771 = vset.pattern.permute.xlu0 5
      %772 = vperm.xlu0 %771, %v229
      %v773 = vpop.permute.xlu0 %772
      %v775 = vmul.f32 %v747, %v761
      %v776 = vmul.f32 %v748, %v761
      %v777 = vmul.f32 %v749, %v761
      %v778 = vmul.f32 %v750, %v765
      %v779 = vmul.f32 %v751, %v765
      %v780 = vmul.f32 %v752, %v765
      %v781 = vmul.f32 %v753, %v769
      %v782 = vmul.f32 %v754, %v769
      %v783 = vmul.f32 %v755, %v769
      %v784 = vmul.f32 %v756, %v773
      %v785 = vmul.f32 %v757, %v773
      %v786 = vmul.f32 %v758, %v773
      %799 = vrot.lane.b32.xlu0 %v775, 110
      %v800 = vpop.permute.xlu0 %799
      %801 = vrot.lane.b32.xlu0 %v776, 110
      %v802 = vpop.permute.xlu0 %801
      %803 = vrot.lane.b32.xlu0 %v777, 110
      %v804 = vpop.permute.xlu0 %803
      %805 = vrot.lane.b32.xlu0 %v778, 110
      %v806 = vpop.permute.xlu0 %805
      %807 = vrot.lane.b32.xlu0 %v779, 110
      %v808 = vpop.permute.xlu0 %807
      %809 = vrot.lane.b32.xlu0 %v780, 110
      %v810 = vpop.permute.xlu0 %809
      %811 = vrot.lane.b32.xlu0 %v781, 110
      %v812 = vpop.permute.xlu0 %811
      %813 = vrot.lane.b32.xlu0 %v782, 110
      %v814 = vpop.permute.xlu0 %813
      %815 = vrot.lane.b32.xlu0 %v783, 110
      %v816 = vpop.permute.xlu0 %815
      %817 = vrot.lane.b32.xlu0 %v784, 110
      %v818 = vpop.permute.xlu0 %817
      %819 = vrot.lane.b32.xlu0 %v785, 110
      %v820 = vpop.permute.xlu0 %819
      %821 = vrot.lane.b32.xlu0 %v786, 110
      %v822 = vpop.permute.xlu0 %821
      %vm823 = vcmask 900096
      %v824 = vsel %vm823, %v800, %v802
      %v825 = vsel %vm823, %v802, %v804
      %v826 = vsel %vm823, %v806, %v808
      %v827 = vsel %vm823, %v808, %v810
      %v828 = vsel %vm823, %v812, %v814
      %v829 = vsel %vm823, %v814, %v816
      %v830 = vsel %vm823, %v818, %v820
      %v831 = vsel %vm823, %v820, %v822
      %v840 = vadd.f32 %v730, %v824
      %v841 = vadd.f32 %v731, %v825
      %v842 = vadd.f32 %v732, %v826
      %v843 = vadd.f32 %v733, %v827
      %v844 = vadd.f32 %v734, %v828
      %v845 = vadd.f32 %v735, %v829
      %v846 = vadd.f32 %v736, %v830
      %v847 = vadd.f32 %v737, %v831
      %848 = vrot.lane.b32.xlu0 %v257, 32
      %v849 = vpop.permute.xlu0 %848
      %850 = vrot.lane.b32.xlu0 %v261, 32
      %v851 = vpop.permute.xlu0 %850
      %vm852 = vcmask 261120
      %v853 = vsel %vm852, %v849, %v851
      %v857 = vmul.f32 %v306, %v849
      %v858 = vmul.f32 %v307, %v853
      %v859 = vmul.f32 %v308, %v851
      %v860 = vmul.f32 %v309, %v849
      %v861 = vmul.f32 %v310, %v853
      %v862 = vmul.f32 %v311, %v851
      %v863 = vmul.f32 %v312, %v849
      %v864 = vmul.f32 %v313, %v853
      %v865 = vmul.f32 %v314, %v851
      %v866 = vmul.f32 %v315, %v849
      %v867 = vmul.f32 %v316, %v853
      %v868 = vmul.f32 %v317, %v851
      %869 = vset.pattern.permute.xlu0 6
      %870 = vperm.xlu0 %869, %v226
      %v871 = vpop.permute.xlu0 %870
      %873 = vset.pattern.permute.xlu0 6
      %874 = vperm.xlu0 %873, %v227
      %v875 = vpop.permute.xlu0 %874
      %877 = vset.pattern.permute.xlu0 6
      %878 = vperm.xlu0 %877, %v228
      %v879 = vpop.permute.xlu0 %878
      %881 = vset.pattern.permute.xlu0 6
      %882 = vperm.xlu0 %881, %v229
      %v883 = vpop.permute.xlu0 %882
      %v885 = vmul.f32 %v857, %v871
      %v886 = vmul.f32 %v858, %v871
      %v887 = vmul.f32 %v859, %v871
      %v888 = vmul.f32 %v860, %v875
      %v889 = vmul.f32 %v861, %v875
      %v890 = vmul.f32 %v862, %v875
      %v891 = vmul.f32 %v863, %v879
      %v892 = vmul.f32 %v864, %v879
      %v893 = vmul.f32 %v865, %v879
      %v894 = vmul.f32 %v866, %v883
      %v895 = vmul.f32 %v867, %v883
      %v896 = vmul.f32 %v868, %v883
      %909 = vrot.lane.b32.xlu0 %v885, 96
      %v910 = vpop.permute.xlu0 %909
      %911 = vrot.lane.b32.xlu0 %v886, 96
      %v912 = vpop.permute.xlu0 %911
      %913 = vrot.lane.b32.xlu0 %v887, 96
      %v914 = vpop.permute.xlu0 %913
      %915 = vrot.lane.b32.xlu0 %v888, 96
      %v916 = vpop.permute.xlu0 %915
      %917 = vrot.lane.b32.xlu0 %v889, 96
      %v918 = vpop.permute.xlu0 %917
      %919 = vrot.lane.b32.xlu0 %v890, 96
      %v920 = vpop.permute.xlu0 %919
      %921 = vrot.lane.b32.xlu0 %v891, 96
      %v922 = vpop.permute.xlu0 %921
      %923 = vrot.lane.b32.xlu0 %v892, 96
      %v924 = vpop.permute.xlu0 %923
      %925 = vrot.lane.b32.xlu0 %v893, 96
      %v926 = vpop.permute.xlu0 %925
      %927 = vrot.lane.b32.xlu0 %v894, 96
      %v928 = vpop.permute.xlu0 %927
      %929 = vrot.lane.b32.xlu0 %v895, 96
      %v930 = vpop.permute.xlu0 %929
      %931 = vrot.lane.b32.xlu0 %v896, 96
      %v932 = vpop.permute.xlu0 %931
      %vm933 = vcmask 785408
      %v934 = vsel %vm933, %v910, %v912
      %v935 = vsel %vm933, %v912, %v914
      %v936 = vsel %vm933, %v916, %v918
      %v937 = vsel %vm933, %v918, %v920
      %v938 = vsel %vm933, %v922, %v924
      %v939 = vsel %vm933, %v924, %v926
      %v940 = vsel %vm933, %v928, %v930
      %v941 = vsel %vm933, %v930, %v932
      %v950 = vadd.f32 %v840, %v934
      %v951 = vadd.f32 %v841, %v935
      %v952 = vadd.f32 %v842, %v936
      %v953 = vadd.f32 %v843, %v937
      %v954 = vadd.f32 %v844, %v938
      %v955 = vadd.f32 %v845, %v939
      %v956 = vadd.f32 %v846, %v940
      %v957 = vadd.f32 %v847, %v941
      %958 = vset.pattern.permute.xlu0 7
      %959 = vperm.xlu0 %958, %v226
      %v960 = vpop.permute.xlu0 %959
      %962 = vset.pattern.permute.xlu0 7
      %963 = vperm.xlu0 %962, %v227
      %v964 = vpop.permute.xlu0 %963
      %966 = vset.pattern.permute.xlu0 7
      %967 = vperm.xlu0 %966, %v228
      %v968 = vpop.permute.xlu0 %967
      %970 = vset.pattern.permute.xlu0 7
      %971 = vperm.xlu0 %970, %v229
      %v972 = vpop.permute.xlu0 %971
      %v974 = vmul.f32 %v306, %v960
      %v975 = vmul.f32 %v307, %v960
      %v976 = vmul.f32 %v308, %v960
      %v977 = vmul.f32 %v309, %v964
      %v978 = vmul.f32 %v310, %v964
      %v979 = vmul.f32 %v311, %v964
      %v980 = vmul.f32 %v312, %v968
      %v981 = vmul.f32 %v313, %v968
      %v982 = vmul.f32 %v314, %v968
      %v983 = vmul.f32 %v315, %v972
      %v984 = vmul.f32 %v316, %v972
      %v985 = vmul.f32 %v317, %v972
      %998 = vrot.lane.b32.xlu0 %v974, 95
      %v999 = vpop.permute.xlu0 %998
      %1000 = vrot.lane.b32.xlu0 %v975, 95
      %v1001 = vpop.permute.xlu0 %1000
      %1002 = vrot.lane.b32.xlu0 %v976, 95
      %v1003 = vpop.permute.xlu0 %1002
      %1004 = vrot.lane.b32.xlu0 %v977, 95
      %v1005 = vpop.permute.xlu0 %1004
      %1006 = vrot.lane.b32.xlu0 %v978, 95
      %v1007 = vpop.permute.xlu0 %1006
      %1008 = vrot.lane.b32.xlu0 %v979, 95
      %v1009 = vpop.permute.xlu0 %1008
      %1010 = vrot.lane.b32.xlu0 %v980, 95
      %v1011 = vpop.permute.xlu0 %1010
      %1012 = vrot.lane.b32.xlu0 %v981, 95
      %v1013 = vpop.permute.xlu0 %1012
      %1014 = vrot.lane.b32.xlu0 %v982, 95
      %v1015 = vpop.permute.xlu0 %1014
      %1016 = vrot.lane.b32.xlu0 %v983, 95
      %v1017 = vpop.permute.xlu0 %1016
      %1018 = vrot.lane.b32.xlu0 %v984, 95
      %v1019 = vpop.permute.xlu0 %1018
      %1020 = vrot.lane.b32.xlu0 %v985, 95
      %v1021 = vpop.permute.xlu0 %1020
      %vm1022 = vcmask 777216
      %v1023 = vsel %vm1022, %v999, %v1001
      %v1024 = vsel %vm1022, %v1001, %v1003
      %v1025 = vsel %vm1022, %v1005, %v1007
      %v1026 = vsel %vm1022, %v1007, %v1009
      %v1027 = vsel %vm1022, %v1011, %v1013
      %v1028 = vsel %vm1022, %v1013, %v1015
      %v1029 = vsel %vm1022, %v1017, %v1019
      %v1030 = vsel %vm1022, %v1019, %v1021
      %v1039 = vadd.f32 %v950, %v1023
      %v1040 = vadd.f32 %v951, %v1024
      %v1041 = vadd.f32 %v952, %v1025
      %v1042 = vadd.f32 %v953, %v1026
      %v1043 = vadd.f32 %v954, %v1027
      %v1044 = vadd.f32 %v955, %v1028
      %v1045 = vadd.f32 %v956, %v1029
      %v1046 = vadd.f32 %v957, %v1030
      %1047 = vrot.lane.b32.xlu0 %v420, 34
      %v1048 = vpop.permute.xlu0 %1047
      %1049 = vrot.lane.b32.xlu0 %v424, 34
      %v1050 = vpop.permute.xlu0 %1049
      %vm1051 = vcmask 277504
      %v1052 = vsel %vm1051, %v1048, %v1050
      %v1056 = vmul.f32 %v306, %v1048
      %v1057 = vmul.f32 %v307, %v1052
      %v1058 = vmul.f32 %v308, %v1050
      %v1059 = vmul.f32 %v309, %v1048
      %v1060 = vmul.f32 %v310, %v1052
      %v1061 = vmul.f32 %v311, %v1050
      %v1062 = vmul.f32 %v312, %v1048
      %v1063 = vmul.f32 %v313, %v1052
      %v1064 = vmul.f32 %v314, %v1050
      %v1065 = vmul.f32 %v315, %v1048
      %v1066 = vmul.f32 %v316, %v1052
      %v1067 = vmul.f32 %v317, %v1050
      %1068 = vset.pattern.permute.xlu0 8
      %1069 = vperm.xlu0 %1068, %v226
      %v1070 = vpop.permute.xlu0 %1069
      %1072 = vset.pattern.permute.xlu0 8
      %1073 = vperm.xlu0 %1072, %v227
      %v1074 = vpop.permute.xlu0 %1073
      %1076 = vset.pattern.permute.xlu0 8
      %1077 = vperm.xlu0 %1076, %v228
      %v1078 = vpop.permute.xlu0 %1077
      %1080 = vset.pattern.permute.xlu0 8
      %1081 = vperm.xlu0 %1080, %v229
      %v1082 = vpop.permute.xlu0 %1081
      %v1084 = vmul.f32 %v1056, %v1070
      %v1085 = vmul.f32 %v1057, %v1070
      %v1086 = vmul.f32 %v1058, %v1070
      %v1087 = vmul.f32 %v1059, %v1074
      %v1088 = vmul.f32 %v1060, %v1074
      %v1089 = vmul.f32 %v1061, %v1074
      %v1090 = vmul.f32 %v1062, %v1078
      %v1091 = vmul.f32 %v1063, %v1078
      %v1092 = vmul.f32 %v1064, %v1078
      %v1093 = vmul.f32 %v1065, %v1082
      %v1094 = vmul.f32 %v1066, %v1082
      %v1095 = vmul.f32 %v1067, %v1082
      %1108 = vrot.lane.b32.xlu0 %v1084, 94
      %v1109 = vpop.permute.xlu0 %1108
      %1110 = vrot.lane.b32.xlu0 %v1085, 94
      %v1111 = vpop.permute.xlu0 %1110
      %1112 = vrot.lane.b32.xlu0 %v1086, 94
      %v1113 = vpop.permute.xlu0 %1112
      %1114 = vrot.lane.b32.xlu0 %v1087, 94
      %v1115 = vpop.permute.xlu0 %1114
      %1116 = vrot.lane.b32.xlu0 %v1088, 94
      %v1117 = vpop.permute.xlu0 %1116
      %1118 = vrot.lane.b32.xlu0 %v1089, 94
      %v1119 = vpop.permute.xlu0 %1118
      %1120 = vrot.lane.b32.xlu0 %v1090, 94
      %v1121 = vpop.permute.xlu0 %1120
      %1122 = vrot.lane.b32.xlu0 %v1091, 94
      %v1123 = vpop.permute.xlu0 %1122
      %1124 = vrot.lane.b32.xlu0 %v1092, 94
      %v1125 = vpop.permute.xlu0 %1124
      %1126 = vrot.lane.b32.xlu0 %v1093, 94
      %v1127 = vpop.permute.xlu0 %1126
      %1128 = vrot.lane.b32.xlu0 %v1094, 94
      %v1129 = vpop.permute.xlu0 %1128
      %1130 = vrot.lane.b32.xlu0 %v1095, 94
      %v1131 = vpop.permute.xlu0 %1130
      %vm1132 = vcmask 769024
      %v1133 = vsel %vm1132, %v1109, %v1111
      %v1134 = vsel %vm1132, %v1111, %v1113
      %v1135 = vsel %vm1132, %v1115, %v1117
      %v1136 = vsel %vm1132, %v1117, %v1119
      %v1137 = vsel %vm1132, %v1121, %v1123
      %v1138 = vsel %vm1132, %v1123, %v1125
      %v1139 = vsel %vm1132, %v1127, %v1129
      %v1140 = vsel %vm1132, %v1129, %v1131
      %v1149 = vadd.f32 %v1039, %v1133
      %v1150 = vadd.f32 %v1040, %v1134
      %v1151 = vadd.f32 %v1041, %v1135
      %v1152 = vadd.f32 %v1042, %v1136
      %v1153 = vadd.f32 %v1043, %v1137
      %v1154 = vadd.f32 %v1044, %v1138
      %v1155 = vadd.f32 %v1045, %v1139
      %v1156 = vadd.f32 %v1046, %v1140
      %1157 = vset.pattern.permute.xlu0 9
      %1158 = vperm.xlu0 %1157, %v226
      %v1159 = vpop.permute.xlu0 %1158
      %1161 = vset.pattern.permute.xlu0 9
      %1162 = vperm.xlu0 %1161, %v227
      %v1163 = vpop.permute.xlu0 %1162
      %1165 = vset.pattern.permute.xlu0 9
      %1166 = vperm.xlu0 %1165, %v228
      %v1167 = vpop.permute.xlu0 %1166
      %1169 = vset.pattern.permute.xlu0 9
      %1170 = vperm.xlu0 %1169, %v229
      %v1171 = vpop.permute.xlu0 %1170
      %v1173 = vadd.f32 %v1149, %v1159
      %v1174 = vadd.f32 %v1150, %v1159
      %v1175 = vadd.f32 %v1151, %v1163
      %v1176 = vadd.f32 %v1152, %v1163
      %v1177 = vadd.f32 %v1153, %v1167
      %v1178 = vadd.f32 %v1154, %v1167
      %v1179 = vadd.f32 %v1155, %v1171
      %v1180 = vadd.f32 %v1156, %v1171
      %vm1181 = vcmp.ge.f32.partialorder %v1173, 0.0
      %vm1182 = vcmp.ge.f32.partialorder %v1174, 0.0
      %vm1183 = vcmp.ge.f32.partialorder %v1175, 0.0
      %vm1184 = vcmp.ge.f32.partialorder %v1176, 0.0
      %vm1185 = vcmp.ge.f32.partialorder %v1177, 0.0
      %vm1186 = vcmp.ge.f32.partialorder %v1178, 0.0
      %vm1187 = vcmp.ge.f32.partialorder %v1179, 0.0
      %vm1188 = vcmp.ge.f32.partialorder %v1180, 0.0
      %v1189 = vmul.f32 %v1173, 0.2
      %v1190 = vmul.f32 %v1174, 0.2
      %v1191 = vmul.f32 %v1175, 0.2
      %v1192 = vmul.f32 %v1176, 0.2
      %v1193 = vmul.f32 %v1177, 0.2
      %v1194 = vmul.f32 %v1178, 0.2
      %v1195 = vmul.f32 %v1179, 0.2
      %v1196 = vmul.f32 %v1180, 0.2
      %v1197 = vsel %vm1181, %v1173, %v1189
      %v1198 = vsel %vm1182, %v1174, %v1190
      %v1199 = vsel %vm1183, %v1175, %v1191
      %v1200 = vsel %vm1184, %v1176, %v1192
      %v1201 = vsel %vm1185, %v1177, %v1193
      %v1202 = vsel %vm1186, %v1178, %v1194
      %v1203 = vsel %vm1187, %v1179, %v1195
      %v1204 = vsel %vm1188, %v1180, %v1196
      %v1205 = vld [vmem:[%s2] sm:$0xf]
      %v1206 = vld [vmem:[%s2 + $0x4] sm:$0xf]
      %v1207 = vld [vmem:[%s2 + $0x8] sm:$0xf]
      %v1208 = vpack.c.bf16 %v1199, %v1197
      %v1209 = vpack.c.bf16 %v1200, %v1198
      %v1210 = vpack.c.bf16 %v1203, %v1201
      %v1211 = vpack.c.bf16 %v1204, %v1202
      %v1212 = vld [vmem:[%s3] sm:$0xff]
      %v1213 = vld [vmem:[%s3 + $0x8] sm:$0xff]
      %v1214 = vld [vmem:[%s3 + $0x10] sm:$0xff]
      %1216 = vset.pattern.permute.xlu0 0
      %1217 = vperm.xlu0 %1216, %v1212
      %v1218 = vpop.permute.xlu0 %1217
      %1221 = vset.pattern.permute.xlu0 0
      %1222 = vperm.xlu0 %1221, %v1213
      %v1223 = vpop.permute.xlu0 %1222
      %1226 = vset.pattern.permute.xlu0 0
      %1227 = vperm.xlu0 %1226, %v1214
      %v1228 = vpop.permute.xlu0 %1227
      %v1233 = vunpack.c.l.b16 %v1205
      %v1234 = vunpack.c.l.b16 %v1206
      %v1235 = vunpack.c.l.b16 %v1207
      %v1236 = vpack.c.b16 %v1234, %v1233
      %v1237 = vpack.c.b16 %v1235, %v1235
      %v1239 = vsel %vm852, %v1236, 0
      %v1242 = vsel %vm852, %v1237, 0
      %1244 = vmatprep.subr.bf16.mxu0 %v1209
      %1245 = vmatpush1.bf16.msra.mxu0 %v1208
      %1246 = vmatprep.subr.bf16.mxu0 %v1211
      %1247 = vmatpush1.bf16.msra.mxu0 %v1210
      %1248 = vmatprep.subr.bf16.mxu0 0
      %1249 = vmatpush1.bf16.msra.mxu0 0
      %1250 = vmatprep.subr.bf16.mxu0 0
      %1251 = vmatpush1.bf16.msra.mxu0 0
      %1252 = vmatprep.subr.bf16.mxu0 0
      %1253 = vmatpush1.bf16.msra.mxu0 0
      %1254 = vmatprep.subr.bf16.mxu0 0
      %1255 = vmatpush1.bf16.msra.mxu0 0
      %1256 = vmatprep.subr.bf16.mxu0 0
      %1257 = vmatpush1.bf16.msra.mxu0 0
      %1258 = vmatprep.subr.bf16.mxu0 0
      %1259 = vmatpush1.bf16.msra.mxu0 0
      %1260 = vmatprep.subr.bf16.mxu0 0
      %1261 = vmatpush1.bf16.msra.mxu0 0
      %1262 = vmatprep.subr.bf16.mxu0 0
      %1263 = vmatpush1.bf16.msra.mxu0 0
      %1264 = vmatprep.subr.bf16.mxu0 0
      %1265 = vmatpush1.bf16.msra.mxu0 0
      %1266 = vmatprep.subr.bf16.mxu0 0
      %1267 = vmatpush1.bf16.msra.mxu0 0
      %1268 = vmatprep.subr.bf16.mxu0 0
      %1269 = vmatpush1.bf16.msra.mxu0 0
      %1270 = vmatprep.subr.bf16.mxu0 0
      %1271 = vmatpush1.bf16.msra.mxu0 0
      %1272 = vmatprep.subr.bf16.mxu0 0
      %1273 = vmatpush1.bf16.msra.mxu0 0
      %1274 = vmatprep.subr.bf16.mxu0 0
      %1275 = vmatpush1.bf16.msra.mxu0 0
      %1276 = vmatprep.mubr.bf16.mxu0 0
      %1277 = vmatmul.mubr.bf16.gmra.mrb[0].mxu0 %v1239
      %v1278 = vpop.f32.mrb[0].mxu0
      %v1279 = vadd.f32 %v1218, %v1278
      %v1280 = vpop.f32.mrb[0].mxu0
      %v1281 = vadd.f32 %v1218, %v1280
      %v1282 = vpop.f32.mrb[0].mxu0
      %v1283 = vadd.f32 %v1223, %v1282
      %v1284 = vpop.f32.mrb[0].mxu0
      %v1285 = vadd.f32 %v1223, %v1284
      %1286 = vmatprep.mubr.bf16.mxu0 0
      %1287 = vmatmul.mubr.bf16.gmra.mrb[0].mxu0 %v1242
      %v1288 = vpop.f32.mrb[0].mxu0
      %v1289 = vadd.f32 %v1228, %v1288
      %v1290 = vpop.f32.mrb[0].mxu0
      %v1291 = vadd.f32 %v1228, %v1290
      %v1292 = vpop.f32.mrb[0].mxu0
      %v1293 = vpop.f32.mrb[0].mxu0
      %1294 = vdwg.mxu0
      %1295 = vst [vmem:[%s224] sm:$0xff] %v1279
      %1296 = vst [vmem:[%s224 + $0x8] sm:$0xff] %v1281
      %1297 = vst [vmem:[%s224 + $0x10] sm:$0xff] %v1283
      %1298 = vst [vmem:[%s224 + $0x18] sm:$0xff] %v1285
      %1299 = vst [vmem:[%s224 + $0x20] sm:$0xff] %v1289
      %1300 = vst [vmem:[%s224 + $0x28] sm:$0xff] %v1291
      %p1301 = scmp.lt.s32.totalorder %s16, 1
      %s1302 = scalar_select %p1301, %s16, 1
      %s1303 = smul.addr %s1302, 6
      %s1304 = smul.addr %s1303, 8
      %s1305 = scalar_lea.vmem %s5, %s1304
      // Predicated region
      $region41: #{up_block_forward.1} parent=39 // pred_check
        %p1306 = pneg %p144
      $region42: #{up_block_forward.1} parent=39 // pred_check_branch
        %1308 = sbr.rel (%p1306) target = $region44
      $region43: #{up_block_forward.1} parent=39 // pred_region
        _
      $region44: #{up_block_forward.1} parent=39 // pred_fallthru
        _
    $region40: #{up_block_forward.1} parent=5 // pred_fallthru
      _
    %p1309 = scmp.le.s32.totalorder 2, %s11
    // Predicated region
    $region45: #{up_block_forward.1} parent=5 // pred_check
      %p1310 = pneg %p1309
    $region46: #{up_block_forward.1} parent=5 // pred_check_branch
      %1312 = sbr.rel (%p1310) target = $region48
    $region47: #{up_block_forward.1} parent=5 // pred_region
      %s1313 = ssub.s32 %s11, 2
      // Predicated region
      $region49: #{up_block_forward.1} parent=47 // pred_check
        %p1314 = pneg %p150
      $region50: #{up_block_forward.1} parent=47 // pred_check_branch
        %1316 = sbr.rel (%p1314) target = $region52
      $region51: #{up_block_forward.1} parent=47 // pred_region
        %p1317 = scmp.lt.s32.totalorder %s17, 1
        %s1318 = scalar_select %p1317, %s17, 1
        %s1319 = smul.addr %s1318, 6
        %s1320 = smul.addr %s1319, 8
        %s1321 = scalar_lea.vmem %s5, %s1320
      $region52: #{up_block_forward.1} parent=47 // pred_fallthru
        _
    $region48: #{up_block_forward.1} parent=5 // pred_fallthru
      _
  $region6: #{up_block_forward.1} parent=0 // loop_footer
    %s15 = sadd.s32 1, %s11
  $region7: #{up_block_forward.1} parent=0 // loop_footer_branch
    %10 = sbr.rel target = $region3
  $region8: #{up_block_forward.1} parent=0 // loop_exit
    _

</llo_original>
